<compile_context>
chip_gen: v5e
topology: v5e:2x2
jax: 0.10.0
libtpu: 0.0.40
codegen_flags: <defaults>
</compile_context>

<pallas_src>
import jax
import jax.numpy as jnp
from jax.experimental import pallas as pl
from jax.experimental.pallas import tpu as pltpu


def _make_fusion_kernel(num_streams: int, weighted: bool):
    if weighted:
        def kernel(w_ref, *refs):
            # w_ref: (TC, S) per-row, per-stream fusion weights (float32)
            # refs : S input refs (TC, THW), then the output ref (TC, THW)
            x_refs = refs[:num_streams]
            o_ref = refs[num_streams]
            w = w_ref[...].astype(jnp.float32)                      # (TC, S)
            acc = x_refs[0][...].astype(jnp.float32) * w[:, 0:1]
            for s in range(1, num_streams):
                acc = acc + x_refs[s][...].astype(jnp.float32) * w[:, s:s + 1]
            o_ref[...] = acc.astype(o_ref.dtype)
    else:
        def kernel(*refs):
            x_refs = refs[:num_streams]
            o_ref = refs[num_streams]
            acc = x_refs[0][...].astype(jnp.float32)
            for s in range(1, num_streams):
                acc = acc + x_refs[s][...].astype(jnp.float32)
            o_ref[...] = acc.astype(o_ref.dtype)
    return kernel


def _pick_tile(dim: int, align: int, max_tile: int) -> int:
    """Block size for `dim`: the full dim if it fits, otherwise the largest
    `align`-multiple <= max_tile.  An exact divisor is only preferred if it lies
    in [max_tile/2, max_tile]; otherwise a partial (masked) last block is used,
    so the tile never collapses to the alignment unit for awkward dims."""
    if dim <= max_tile:
        return dim
    top = max(align, (max_tile // align) * align)
    t = top
    lo = max(align, top // 2)
    while t >= lo:
        if dim % t == 0:
            return t
        t -= align
    return top


def fusion_block_forward(xs, fusion_weights=None):
    """Pallas implementation of FusionBlock.forward.

    xs:              list of S arrays, each (N, C, H, W)
    fusion_weights:  (S, C) array or None (unweighted sum)
    returns:         (N, C, H, W)
    """
    num_streams = len(xs)
    N, C, H, W = xs[0].shape
    HW = H * W
    R = N * C
    dtype = xs[0].dtype
    itemsize = jnp.dtype(dtype).itemsize

    # Free contiguous reshapes: fuse N*C into the sublane (row) axis.
    xs_flat = [x.reshape(R, HW) for x in xs]

    weighted = fusion_weights is not None
    if weighted:
        # Keep weights in float32 (tiny array) to avoid an extra rounding step.
        w32 = jnp.asarray(fusion_weights, dtype=jnp.float32)        # (S, C)
        w_rows = jnp.tile(w32.T, (N, 1))                            # (N*C, S)

    # ---- generation-aware VMEM budget ---------------------------------------
    try:
        vmem_cap = int(pltpu.get_tpu_info().vmem_capacity_bytes)
    except Exception:
        vmem_cap = 64 * 1024 * 1024  # conservative (v7x-sized) fallback
    # Use at most half of physical VMEM, capped at 48 MiB (v5e/v6e: 128 MiB
    # physical -> 48 MiB; v7x: 64 MiB physical -> 32 MiB).
    budget = min(vmem_cap // 2, 48 * 1024 * 1024)

    # ---- tile selection ------------------------------------------------------
    # Dtype-aware sublane alignment: 8 rows (f32), 16 (bf16), 32 (int8/fp8).
    sub_align = max(8, 32 // itemsize)
    TC = _pick_tile(R, sub_align, 256)

    # Bytes per lane column of the block footprint:
    #   (S inputs + 1 output) double-buffered blocks + ~one f32 block of scratch
    #   for the unrolled cast/FMA chain.
    per_lane_bytes = (num_streams + 1) * 2 * TC * itemsize + 2 * TC * 4
    # Fixed overhead: weight blocks pad their lane dim to 128 (f32, double
    # buffered) plus ~2 MiB headroom for Mosaic internal scratch.
    fixed_bytes = (2 * TC * 128 * 4 if weighted else 0) + 2 * 1024 * 1024
    avail = max(budget - fixed_bytes, 512 * 1024)
    max_thw = max(128, min(avail // per_lane_bytes, 16384) // 128 * 128)
    THW = _pick_tile(HW, 128, max_thw)

    # Keep >= 4 grid steps on sizeable inputs so the v7x megacore split stays
    # balanced (shrinking THW keeps the 128-lane alignment).
    if R * HW * itemsize >= (1 << 20):
        while pl.cdiv(R, TC) * pl.cdiv(HW, THW) < 4 and THW >= 1024:
            THW = ((THW // 2) + 127) // 128 * 128

    grid = (pl.cdiv(R, TC), pl.cdiv(HW, THW))

    x_spec = pl.BlockSpec((TC, THW), lambda ri, hi: (ri, hi))
    out_spec = pl.BlockSpec((TC, THW), lambda ri, hi: (ri, hi))
    if weighted:
        w_spec = pl.BlockSpec((TC, num_streams), lambda ri, hi: (ri, 0))
        in_specs = [w_spec] + [x_spec] * num_streams
        args = (w_rows, *xs_flat)
    else:
        in_specs = [x_spec] * num_streams
        args = tuple(xs_flat)

    vmem_limit = int(min(vmem_cap * 3 // 4, budget + 8 * 1024 * 1024))

    out = pl.pallas_call(
        _make_fusion_kernel(num_streams, weighted),
        out_shape=jax.ShapeDtypeStruct((R, HW), dtype),
        grid=grid,
        in_specs=in_specs,
        out_specs=out_spec,
        compiler_params=pltpu.CompilerParams(
            dimension_semantics=("parallel", "parallel"),
            vmem_limit_bytes=vmem_limit,
        ),
    )(*args)

    return out.reshape(N, C, H, W)


if __name__ == "__main__":
    # Small deterministic example consistent with the module's forward:
    # num_streams=3 tensors of shape (N=2, C=4, H=16, W=16).
    key = jax.random.PRNGKey(0)
    num_streams, N, C, H, W = 3, 2, 4, 16, 16

    k_w, *k_xs = jax.random.split(key, num_streams + 1)
    xs = [jax.random.normal(k, (N, C, H, W), dtype=jnp.float32) for k in k_xs]
    # torch.rand(S, C) equivalent: uniform [0, 1)
    fusion_weights = jax.random.uniform(k_w, (num_streams, C), dtype=jnp.float32)

    out = jax.block_until_ready(fusion_block_forward(xs, fusion_weights))

    # Pure-JAX reference check (weighted path).
    ref = sum(x * fusion_weights[s].reshape(C, 1, 1) for s, x in enumerate(xs))
    assert out.shape == (N, C, H, W)
    assert jnp.allclose(out, ref, atol=1e-5, rtol=1e-5)

    # Unweighted path (weighted=False): plain sum over streams.
    out_unweighted = jax.block_until_ready(fusion_block_forward(xs, None))
    assert jnp.allclose(out_unweighted, sum(xs), atol=1e-5, rtol=1e-5)

    print("KERNEL_OK")
</pallas_src>

<mosaic_0001>
module attributes {stable_mosaic.version = 11 : i64} {
  func.func @kernel(%arg0: i32, %arg1: i32, %arg2: memref<8x3xf32, #tpu.memory_space<vmem>>, %arg3: memref<8x256xf32, #tpu.memory_space<vmem>>, %arg4: memref<8x256xf32, #tpu.memory_space<vmem>>, %arg5: memref<8x256xf32, #tpu.memory_space<vmem>>, %arg6: memref<8x256xf32, #tpu.memory_space<vmem>>) attributes {dimension_semantics = [#tpu.dimension_semantics<parallel>, #tpu.dimension_semantics<parallel>], iteration_bounds = array<i64: 1, 1>, scalar_prefetch = 0 : i64, scratch_operands = 0 : i64, tpu.core_type = #tpu.core_type<tc>, window_params = [{transform_indices = @transform_0, window_bounds = array<i64: 8, 3>}, {transform_indices = @transform_1, window_bounds = array<i64: 8, 256>}, {transform_indices = @transform_2, window_bounds = array<i64: 8, 256>}, {transform_indices = @transform_3, window_bounds = array<i64: 8, 256>}, {transform_indices = @transform_4, window_bounds = array<i64: 8, 256>}]} {
    %c0 = arith.constant 0 : index
    %c0_0 = arith.constant 0 : index
    %0 = vector.load %arg2[%c0, %c0_0] : memref<8x3xf32, #tpu.memory_space<vmem>>, vector<8x3xf32>
    %c0_1 = arith.constant 0 : index
    %c0_2 = arith.constant 0 : index
    %1 = vector.load %arg3[%c0_1, %c0_2] : memref<8x256xf32, #tpu.memory_space<vmem>>, vector<8x256xf32>
    %2 = vector.extract_strided_slice %0 {offsets = [0, 0], sizes = [8, 1], strides = [1, 1]} : vector<8x3xf32> to vector<8x1xf32>
    %3 = vector.broadcast %2 : vector<8x1xf32> to vector<8x256xf32>
    %4 = arith.mulf %1, %3 : vector<8x256xf32>
    %c0_3 = arith.constant 0 : index
    %c0_4 = arith.constant 0 : index
    %5 = vector.load %arg4[%c0_3, %c0_4] : memref<8x256xf32, #tpu.memory_space<vmem>>, vector<8x256xf32>
    %6 = vector.extract_strided_slice %0 {offsets = [0, 1], sizes = [8, 1], strides = [1, 1]} : vector<8x3xf32> to vector<8x1xf32>
    %7 = vector.broadcast %6 : vector<8x1xf32> to vector<8x256xf32>
    %8 = arith.mulf %5, %7 : vector<8x256xf32>
    %9 = arith.addf %4, %8 : vector<8x256xf32>
    %c0_5 = arith.constant 0 : index
    %c0_6 = arith.constant 0 : index
    %10 = vector.load %arg5[%c0_5, %c0_6] : memref<8x256xf32, #tpu.memory_space<vmem>>, vector<8x256xf32>
    %11 = vector.extract_strided_slice %0 {offsets = [0, 2], sizes = [8, 1], strides = [1, 1]} : vector<8x3xf32> to vector<8x1xf32>
    %12 = vector.broadcast %11 : vector<8x1xf32> to vector<8x256xf32>
    %13 = arith.mulf %10, %12 : vector<8x256xf32>
    %14 = arith.addf %9, %13 : vector<8x256xf32>
    %c0_7 = arith.constant 0 : index
    %c0_8 = arith.constant 0 : index
    %15 = vector.load %arg6[%c0_7, %c0_8] : memref<8x256xf32, #tpu.memory_space<vmem>>, vector<8x256xf32>
    tpu.vector_store %arg6[%c0_7, %c0_8], %14 {strides = array<i32>} : memref<8x256xf32, #tpu.memory_space<vmem>>, vector<8x256xf32>,
    return
  }
  func.func @transform_0(%arg0: i32, %arg1: i32) -> (i32, i32) {
    %c0_i32 = arith.constant 0 : i32
    %c0_i32_0 = arith.constant 0 : i32
    return %arg0, %c0_i32 : i32, i32
  }
  func.func @transform_1(%arg0: i32, %arg1: i32) -> (i32, i32) {
    %c0_i32 = arith.constant 0 : i32
    return %arg0, %arg1 : i32, i32
  }
  func.func @transform_2(%arg0: i32, %arg1: i32) -> (i32, i32) {
    %c0_i32 = arith.constant 0 : i32
    return %arg0, %arg1 : i32, i32
  }
  func.func @transform_3(%arg0: i32, %arg1: i32) -> (i32, i32) {
    %c0_i32 = arith.constant 0 : i32
    return %arg0, %arg1 : i32, i32
  }
  func.func @transform_4(%arg0: i32, %arg1: i32) -> (i32, i32) {
    %c0_i32 = arith.constant 0 : i32
    return %arg0, %arg1 : i32, i32
  }
}

</mosaic_0001>

<llo_original>
// kernel: tpu_custom_call.1
$region0: #{tpu_custom_call.1}
  #allocation0 [shape = 'u32[]', space=smem, size = 0x4, offset = 0x4, fixed_abs, tag = 'smem constant byte address 0x4 - core index']
  #allocation1 [shape = 'u32[72,128]{1,0:T(1,128)}', space=vmem, size = 0x9000, scoped, tag = 'internal scratch']
  %s0 = inlined_call_operand.vmem [shape: f32[8,3], index: 0, kind: input, shape index: {}]
  %s1 = inlined_call_operand.hbm [shape: f32[8,256], index: 1, kind: input, shape index: {}]
  %s2 = inlined_call_operand.hbm [shape: f32[8,256], index: 2, kind: input, shape index: {}]
  %s3 = inlined_call_operand.hbm [shape: f32[8,256], index: 3, kind: input, shape index: {}]
  %s4 = inlined_call_operand.hbm [shape: f32[8,256], index: 4, kind: output, shape index: {}]
  %s5 = sld [smem:[#allocation0]]
  $region38: #{tpu_custom_call.1} parent=0
    _
  %s7 = ssub.s32 1, %s5
  %s8 = scalar_select 0, %s7, %s5
  $region1: #{tpu_custom_call.1} parent=0
    #allocation2 [shape = 'u8[8192]{0}', space=vmem, size = 0x2000, scoped, tag = 'input window, operand 1, single buffered']
    #allocation3 [shape = 's32[1]{0}', space=sflag, size = 0x4, scoped, tag = 'scoped memory for tpu_custom_call.1']
    #allocation4 [shape = 's32[1]{0}', space=sflag, size = 0x4, scoped, tag = 'scoped memory for tpu_custom_call.1']
    #allocation5 [shape = 'u8[8192]{0}', space=vmem, size = 0x2000, scoped, tag = 'input window, operand 2, single buffered']
    #allocation6 [shape = 's32[1]{0}', space=sflag, size = 0x4, scoped, tag = 'scoped memory for tpu_custom_call.1']
    #allocation7 [shape = 'u8[8192]{0}', space=vmem, size = 0x2000, scoped, tag = 'input window, operand 3, single buffered']
    #allocation8 [shape = 'u8[8192]{0}', space=vmem, size = 0x2000, scoped, tag = 'output window, operand 0, single buffered']
    %9 = vsyncpa [#allocation3], 0
    %10 = vsyncpa [#allocation6], 0
    %11 = vsyncpa [#allocation4], 0
    // Predicated region
    $region2: #{tpu_custom_call.1} parent=1 // pred_check
      _
    $region3: #{tpu_custom_call.1} parent=1 // pred_check_branch
      %13 = sbr.rel (0) target = $region5
    $region4: #{tpu_custom_call.1} parent=1 // pred_region
      _
    $region5: #{tpu_custom_call.1} parent=1 // pred_fallthru
      _
    // Predicated region
    $region6: #{tpu_custom_call.1} parent=1 // pred_check
      _
    $region7: #{tpu_custom_call.1} parent=1 // pred_check_branch
      %15 = sbr.rel (0) target = $region9
    $region8: #{tpu_custom_call.1} parent=1 // pred_region
      %17 = vsyncadd [#allocation3], 0
      %s19 = sshll.u32 %s1, 4
      %s20 = int_to_ptr.hbm [resolvable:$true] %s19
      %s21 = sshll.u32 [#allocation2], 4
      %s22 = int_to_ptr.vmem [resolvable:$true] %s21
      %24 = dma.hbm_to_vmem [thread:$0]  %s20, 256, %s22, [#allocation3]
    $region9: #{tpu_custom_call.1} parent=1 // pred_fallthru
      _
    // Predicated region
    $region10: #{tpu_custom_call.1} parent=1 // pred_check
      _
    $region11: #{tpu_custom_call.1} parent=1 // pred_check_branch
      %26 = sbr.rel (0) target = $region13
    $region12: #{tpu_custom_call.1} parent=1 // pred_region
      %28 = vsyncadd [#allocation6], 0
      %s30 = sshll.u32 %s2, 4
      %s31 = int_to_ptr.hbm [resolvable:$true] %s30
      %s32 = sshll.u32 [#allocation5], 4
      %s33 = int_to_ptr.vmem [resolvable:$true] %s32
      %35 = dma.hbm_to_vmem [thread:$0]  %s31, 256, %s33, [#allocation6]
    $region13: #{tpu_custom_call.1} parent=1 // pred_fallthru
      _
    // Predicated region
    $region14: #{tpu_custom_call.1} parent=1 // pred_check
      _
    $region15: #{tpu_custom_call.1} parent=1 // pred_check_branch
      %37 = sbr.rel (0) target = $region17
    $region16: #{tpu_custom_call.1} parent=1 // pred_region
      %39 = vsyncadd [#allocation6], 0
      %s41 = sshll.u32 %s3, 4
      %s42 = int_to_ptr.hbm [resolvable:$true] %s41
      %s43 = sshll.u32 [#allocation7], 4
      %s44 = int_to_ptr.vmem [resolvable:$true] %s43
      %46 = dma.hbm_to_vmem [thread:$0]  %s42, 256, %s44, [#allocation6]
    $region17: #{tpu_custom_call.1} parent=1 // pred_fallthru
      _
    // Predicated region
    $region18: #{tpu_custom_call.1} parent=1 // pred_check
      _
    $region19: #{tpu_custom_call.1} parent=1 // pred_check_branch
      %48 = sbr.rel (0) target = $region21
    $region20: #{tpu_custom_call.1} parent=1 // pred_region
      %50 = dma.done [#allocation3], 256
    $region21: #{tpu_custom_call.1} parent=1 // pred_fallthru
      _
    // Predicated region
    $region22: #{tpu_custom_call.1} parent=1 // pred_check
      _
    $region23: #{tpu_custom_call.1} parent=1 // pred_check_branch
      %52 = sbr.rel (0) target = $region25
    $region24: #{tpu_custom_call.1} parent=1 // pred_region
      %54 = dma.done [#allocation6], 256
    $region25: #{tpu_custom_call.1} parent=1 // pred_fallthru
      _
    // Predicated region
    $region26: #{tpu_custom_call.1} parent=1 // pred_check
      _
    $region27: #{tpu_custom_call.1} parent=1 // pred_check_branch
      %56 = sbr.rel (0) target = $region29
    $region28: #{tpu_custom_call.1} parent=1 // pred_region
      %58 = dma.done [#allocation6], 256
    $region29: #{tpu_custom_call.1} parent=1 // pred_fallthru
      _
    %v59 = vld [vmem:[%s0] sm:$0xff]
    %v60 = vld [vmem:[#allocation2] sm:$0xff]
    %v61 = vld [vmem:[#allocation2 + $0x8] sm:$0xff]
    %63 = vset.pattern.permute.xlu0 0
    %64 = vperm.xlu0 %63, %v59
    %v65 = vpop.permute.xlu0 %64
    %v67 = vmul.f32 %v60, %v65
    %v68 = vmul.f32 %v61, %v65
    %v69 = vld [vmem:[#allocation5] sm:$0xff]
    %v70 = vld [vmem:[#allocation5 + $0x8] sm:$0xff]
    %71 = vset.pattern.permute.xlu0 1
    %72 = vperm.xlu0 %71, %v59
    %v73 = vpop.permute.xlu0 %72
    %v75 = vmul.f32 %v69, %v73
    %v76 = vmul.f32 %v70, %v73
    %v77 = vadd.f32 %v67, %v75
    %v78 = vadd.f32 %v68, %v76
    %v79 = vld [vmem:[#allocation7] sm:$0xff]
    %v80 = vld [vmem:[#allocation7 + $0x8] sm:$0xff]
    %81 = vset.pattern.permute.xlu0 2
    %82 = vperm.xlu0 %81, %v59
    %v83 = vpop.permute.xlu0 %82
    %v85 = vmul.f32 %v79, %v83
    %v86 = vmul.f32 %v80, %v83
    %v87 = vadd.f32 %v77, %v85
    %v88 = vadd.f32 %v78, %v86
    %89 = vst [vmem:[#allocation8] sm:$0xff] %v87
    %90 = vst [vmem:[#allocation8 + $0x8] sm:$0xff] %v88
    // Predicated region
    $region30: #{tpu_custom_call.1} parent=1 // pred_check
      _
    $region31: #{tpu_custom_call.1} parent=1 // pred_check_branch
      %92 = sbr.rel (0) target = $region33
    $region32: #{tpu_custom_call.1} parent=1 // pred_region
      %94 = vsyncadd [#allocation4], 0
      %s96 = sshll.u32 [#allocation8], 4
      %s97 = int_to_ptr.vmem [resolvable:$true] %s96
      %s98 = sshll.u32 %s4, 4
      %s99 = int_to_ptr.hbm [resolvable:$true] %s98
      %101 = dma.vmem_to_hbm [thread:$0]  %s97, 256, %s99, [#allocation4]
    $region33: #{tpu_custom_call.1} parent=1 // pred_fallthru
      _
    // Predicated region
    $region34: #{tpu_custom_call.1} parent=1 // pred_check
      _
    $region35: #{tpu_custom_call.1} parent=1 // pred_check_branch
      %103 = sbr.rel (0) target = $region37
    $region36: #{tpu_custom_call.1} parent=1 // pred_region
      %105 = dma.done [#allocation4], 256
    $region37: #{tpu_custom_call.1} parent=1 // pred_fallthru
      _
    %106 = vsyncpa [#allocation3], 1
    %107 = vsyncpa [#allocation6], 1
    %108 = vsyncpa [#allocation4], 1

</llo_original>
